<compile_context>
chip_gen: v6e
topology: v6e:2x2x1
jax: 0.10.0
libtpu: 0.0.40
codegen_flags: <defaults>
</compile_context>

<pallas_src>
import jax
import jax.numpy as jnp
from jax import lax
from jax.experimental import pallas as pl
from jax.experimental.pallas import tpu as pltpu


def _net_kernel(col_ref, k_ref, b_ref, o_ref):
    """One MXU contraction + bias + ReLU epilogue per grid step.

    col_ref : (bm, 9*C)  bf16  im2col rows (built in the wrapper)   (VMEM)
    k_ref   : (9*C, Cout) bf16 folded conv weight, (kh,kw,c) rows   (VMEM)
    b_ref   : (1, Cout)  f32   folded bias                          (VMEM)
    o_ref   : (bm, Cout) f32   output rows in (n, h, w) order       (VMEM)
    """
    acc = jnp.dot(col_ref[...], k_ref[...],
                  preferred_element_type=jnp.float32)
    o_ref[...] = jnp.maximum(acc + b_ref[...], 0.0)


def _num_m_blocks():
    """2 blocks on v7x (2 TensorCores/chip), 1 elsewhere (avoid per-step overhead)."""
    try:
        kind = jax.devices()[0].device_kind.lower()
        if "v7" in kind:
            return 2
    except Exception:  # pragma: no cover - conservative fallback
        pass
    return 1


def net_forward(x_nchw, w1, w2, k1, b1, k2, b2):
    """Forward pass of `Net`.  x_nchw: (N, C, H, W) f32; k1/k2: (3,3,C,Cout) HWIO."""
    N, C, H, W = x_nchw.shape
    Cout = k1.shape[-1]
    M = N * H * W
    K = 9 * C

    # --- Fold the two convolutions into one (linear in the weights; exact). ---
    w1 = jnp.asarray(w1, jnp.float32)
    w2 = jnp.asarray(w2, jnp.float32)
    k_c = (w1 * k1 + w2 * k2).reshape(K, Cout).astype(jnp.bfloat16)   # rows: (kh,kw,c)
    b_c = (w1 * b1 + w2 * b2).reshape(1, Cout).astype(jnp.float32)

    # --- im2col in the wrapper (fuses into a single XLA fusion). ---
    # NCHW -> NHWC, bf16 for the MXU, zero-pad spatial dims by 1 (padding=1).
    x_nhwc = jnp.transpose(x_nchw, (0, 2, 3, 1)).astype(jnp.bfloat16)
    x_pad = jnp.pad(x_nhwc, ((0, 0), (1, 1), (1, 1), (0, 0)))
    taps = [x_pad[:, kh:kh + H, kw:kw + W, :]          # each (N, H, W, C)
            for kh in range(3) for kw in range(3)]
    col = jnp.concatenate(taps, axis=-1).reshape(M, K)  # columns ordered (kh,kw,c)

    # --- Grid over M: 2 "parallel" halves on v7x, single step on v5e/v6e. ---
    n_blocks = _num_m_blocks()
    if M % n_blocks != 0:
        n_blocks = 1
    bm = M // n_blocks

    cost = pl.CostEstimate(
        flops=2 * M * K * Cout,
        transcendentals=0,
        bytes_accessed=(M * K * 2) + (K * Cout * 2) + (Cout * 4) + (M * Cout * 4),
    )

    out_flat = pl.pallas_call(
        _net_kernel,
        out_shape=jax.ShapeDtypeStruct((M, Cout), jnp.float32),
        grid=(n_blocks,),
        in_specs=[
            pl.BlockSpec((bm, K), lambda i: (i, 0)),       # col rows for this block
            pl.BlockSpec((K, Cout), lambda i: (0, 0)),      # folded weight (shared)
            pl.BlockSpec((1, Cout), lambda i: (0, 0)),      # folded bias (shared)
        ],
        out_specs=pl.BlockSpec((bm, Cout), lambda i: (i, 0)),
        compiler_params=pltpu.CompilerParams(
            dimension_semantics=("parallel",)),
        cost_estimate=cost,
    )(col, k_c, b_c)

    # Rows are in (n, h, w) order -> back to NCHW like the PyTorch module.
    out_nhwc = out_flat.reshape(N, H, W, Cout)
    return jnp.transpose(out_nhwc, (0, 3, 1, 2))


def _reference_forward(x_nchw, w1, w2, k1, b1, k2, b2):
    """Pure-JAX reference matching the kernel's bf16-input / f32-accumulate numerics."""
    w1 = jnp.asarray(w1, jnp.float32)
    w2 = jnp.asarray(w2, jnp.float32)
    k_c = (w1 * k1 + w2 * k2).astype(jnp.bfloat16).astype(jnp.float32)
    b_c = (w1 * b1 + w2 * b2).astype(jnp.float32)
    x_nhwc = (jnp.transpose(x_nchw, (0, 2, 3, 1))
              .astype(jnp.bfloat16).astype(jnp.float32))
    dn = lax.conv_dimension_numbers(x_nhwc.shape, k_c.shape,
                                    ("NHWC", "HWIO", "NHWC"))
    c = lax.conv_general_dilated(x_nhwc, k_c, (1, 1), "SAME",
                                 dimension_numbers=dn,
                                 precision=lax.Precision.HIGHEST) + b_c
    y = jnp.maximum(c, 0.0)
    return jnp.transpose(y, (0, 3, 1, 2))


if __name__ == "__main__":
    # Small shapes consistent with the module (the convs require C_in = C_out = 32).
    N, C, H, W = 2, 32, 16, 16
    Cout = 32

    key = jax.random.PRNGKey(0)
    kx, kk1, kb1, kk2, kb2 = jax.random.split(key, 5)

    x = jax.random.normal(kx, (N, C, H, W), dtype=jnp.float32)

    # Deterministic synthetic parameters (HWIO conv weights, per-channel biases).
    k1 = 0.05 * jax.random.normal(kk1, (3, 3, C, Cout), dtype=jnp.float32)
    b1 = 0.01 * jax.random.normal(kb1, (Cout,), dtype=jnp.float32)
    k2 = 0.05 * jax.random.normal(kk2, (3, 3, C, Cout), dtype=jnp.float32)
    b2 = 0.01 * jax.random.normal(kb2, (Cout,), dtype=jnp.float32)
    w1 = jnp.float32(0.5)   # nn.Parameter filled with 0.5
    w2 = jnp.float32(0.5)

    out = net_forward(x, w1, w2, k1, b1, k2, b2)
    out = jax.block_until_ready(out)

    ref = _reference_forward(x, w1, w2, k1, b1, k2, b2)
    assert out.shape == (N, Cout, H, W)
    assert jnp.allclose(out, ref, atol=1e-2, rtol=1e-2), "mismatch vs reference"

    print("KERNEL_OK")
</pallas_src>

<mosaic_0001>
module attributes {stable_mosaic.version = 11 : i64} {
  func.func @_net_kernel(%arg0: i32, %arg1: memref<512x288xbf16, #tpu.memory_space<vmem>>, %arg2: memref<288x32xbf16, #tpu.memory_space<vmem>>, %arg3: memref<1x32xf32, #tpu.memory_space<vmem>>, %arg4: memref<512x32xf32, #tpu.memory_space<vmem>>) attributes {dimension_semantics = [#tpu.dimension_semantics<parallel>], iteration_bounds = array<i64: 1>, scalar_prefetch = 0 : i64, scratch_operands = 0 : i64, tpu.core_type = #tpu.core_type<tc>, window_params = [{transform_indices = @transform_0, window_bounds = array<i64: 512, 288>}, {pipeline_mode = #tpu.pipeline_mode<synchronous>, transform_indices = @transform_1, window_bounds = array<i64: 288, 32>}, {pipeline_mode = #tpu.pipeline_mode<synchronous>, transform_indices = @transform_2, window_bounds = array<i64: 1, 32>}, {transform_indices = @transform_3, window_bounds = array<i64: 512, 32>}]} {
    %c0 = arith.constant 0 : index
    %c0_0 = arith.constant 0 : index
    %0 = vector.load %arg1[%c0, %c0_0] : memref<512x288xbf16, #tpu.memory_space<vmem>>, vector<512x288xbf16>
    %c0_1 = arith.constant 0 : index
    %c0_2 = arith.constant 0 : index
    %1 = vector.load %arg2[%c0_1, %c0_2] : memref<288x32xbf16, #tpu.memory_space<vmem>>, vector<288x32xbf16>
    %cst = arith.constant dense<0.000000e+00> : vector<512x32xf32>
    %2 = tpu.matmul %0, %1, %cst {dimension_numbers = #tpu.dot_dimension_numbers<[1], [0], [0], [1], [0, 0, 1, 1], [], []>} : vector<512x288xbf16>, vector<288x32xbf16>, vector<512x32xf32> -> vector<512x32xf32>
    %c0_3 = arith.constant 0 : index
    %c0_4 = arith.constant 0 : index
    %3 = vector.load %arg3[%c0_3, %c0_4] : memref<1x32xf32, #tpu.memory_space<vmem>>, vector<1x32xf32>
    %4 = vector.broadcast %3 : vector<1x32xf32> to vector<512x32xf32>
    %5 = arith.addf %2, %4 : vector<512x32xf32>
    %cst_5 = arith.constant 0.000000e+00 : f32
    %6 = vector.broadcast %cst_5 : f32 to vector<512x32xf32>
    %7 = arith.maximumf %5, %6 : vector<512x32xf32>
    %c0_6 = arith.constant 0 : index
    %c0_7 = arith.constant 0 : index
    %8 = vector.load %arg4[%c0_6, %c0_7] : memref<512x32xf32, #tpu.memory_space<vmem>>, vector<512x32xf32>
    tpu.vector_store %arg4[%c0_6, %c0_7], %7 {strides = array<i32>} : memref<512x32xf32, #tpu.memory_space<vmem>>, vector<512x32xf32>,
    return
  }
  func.func @transform_0(%arg0: i32) -> (i32, i32) {
    %c0_i32 = arith.constant 0 : i32
    %c0_i32_0 = arith.constant 0 : i32
    return %arg0, %c0_i32 : i32, i32
  }
  func.func @transform_1(%arg0: i32) -> (i32, i32) {
    %c0_i32 = arith.constant 0 : i32
    %c0_i32_0 = arith.constant 0 : i32
    %c0_i32_1 = arith.constant 0 : i32
    return %c0_i32, %c0_i32_0 : i32, i32
  }
  func.func @transform_2(%arg0: i32) -> (i32, i32) {
    %c0_i32 = arith.constant 0 : i32
    %c0_i32_0 = arith.constant 0 : i32
    %c0_i32_1 = arith.constant 0 : i32
    return %c0_i32, %c0_i32_0 : i32, i32
  }
  func.func @transform_3(%arg0: i32) -> (i32, i32) {
    %c0_i32 = arith.constant 0 : i32
    %c0_i32_0 = arith.constant 0 : i32
    return %arg0, %c0_i32 : i32, i32
  }
}

</mosaic_0001>

<llo_original>
// kernel: tpu_custom_call.1
$region0: #{tpu_custom_call.1}
  #allocation0 [shape = 'u32[]', space=smem, size = 0x4, offset = 0x4, fixed_abs, tag = 'smem constant byte address 0x4 - core index']
  #allocation1 [shape = 'u32[144,128]{1,0:T(1,128)}', space=vmem, size = 0x12000, scoped, tag = 'internal scratch']
  %s0 = inlined_call_operand.vmem [shape: bf16[512,288], index: 0, kind: input, shape index: {}]
  %s1 = inlined_call_operand.vmem [shape: bf16[288,32], index: 1, kind: input, shape index: {}]
  %s2 = inlined_call_operand.vmem [shape: f32[1,32], index: 2, kind: input, shape index: {}]
  %s3 = inlined_call_operand.vmem [shape: f32[512,32], index: 3, kind: output, shape index: {}]
  %s4 = sld [smem:[#allocation0]]
  $region22: #{tpu_custom_call.1} parent=0
    _
  %s6 = ssub.s32 1, %s4
  %s7 = scalar_select 0, %s6, %s4
  // Predicated region
  $region2: #{tpu_custom_call.1} parent=0 // pred_check
    _
  $region3: #{tpu_custom_call.1} parent=0 // pred_check_branch
    %9 = sbr.rel (0) target = $region5
  $region4: #{tpu_custom_call.1} parent=0 // pred_region
    _
  $region5: #{tpu_custom_call.1} parent=0 // pred_fallthru
    _
  // Predicated region
  $region6: #{tpu_custom_call.1} parent=0 // pred_check
    _
  $region7: #{tpu_custom_call.1} parent=0 // pred_check_branch
    %11 = sbr.rel (0) target = $region9
  $region8: #{tpu_custom_call.1} parent=0 // pred_region
    _
  $region9: #{tpu_custom_call.1} parent=0 // pred_fallthru
    _
  // Predicated region
  $region10: #{tpu_custom_call.1} parent=0 // pred_check
    _
  $region11: #{tpu_custom_call.1} parent=0 // pred_check_branch
    %13 = sbr.rel (0) target = $region13
  $region12: #{tpu_custom_call.1} parent=0 // pred_region
    _
  $region13: #{tpu_custom_call.1} parent=0 // pred_fallthru
    _
  %v15 = vld [vmem:[%s0] sm:$0xff]
  %v16 = vld [vmem:[%s0 + $0x8] sm:$0xf]
  %v17 = vld [vmem:[%s0 + $0xc] sm:$0xff]
  %v18 = vld [vmem:[%s0 + $0x14] sm:$0xf]
  %v19 = vld [vmem:[%s0 + $0x18] sm:$0xff]
  %v20 = vld [vmem:[%s0 + $0x20] sm:$0xf]
  %v21 = vld [vmem:[%s0 + $0x24] sm:$0xff]
  %v22 = vld [vmem:[%s0 + $0x2c] sm:$0xf]
  %v23 = vld [vmem:[%s0 + $0x30] sm:$0xff]
  %v24 = vld [vmem:[%s0 + $0x38] sm:$0xf]
  %v25 = vld [vmem:[%s0 + $0x3c] sm:$0xff]
  %v26 = vld [vmem:[%s0 + $0x44] sm:$0xf]
  %v27 = vld [vmem:[%s0 + $0x48] sm:$0xff]
  %v28 = vld [vmem:[%s0 + $0x50] sm:$0xf]
  %v29 = vld [vmem:[%s0 + $0x54] sm:$0xff]
  %v30 = vld [vmem:[%s0 + $0x5c] sm:$0xf]
  %v31 = vld [vmem:[%s0 + $0x60] sm:$0xff]
  %v32 = vld [vmem:[%s0 + $0x68] sm:$0xf]
  %v33 = vld [vmem:[%s0 + $0x6c] sm:$0xff]
  %v34 = vld [vmem:[%s0 + $0x74] sm:$0xf]
  %v35 = vld [vmem:[%s0 + $0x78] sm:$0xff]
  %v36 = vld [vmem:[%s0 + $0x80] sm:$0xf]
  %v37 = vld [vmem:[%s0 + $0x84] sm:$0xff]
  %v38 = vld [vmem:[%s0 + $0x8c] sm:$0xf]
  %v39 = vld [vmem:[%s0 + $0x90] sm:$0xff]
  %v40 = vld [vmem:[%s0 + $0x98] sm:$0xf]
  %v41 = vld [vmem:[%s0 + $0x9c] sm:$0xff]
  %v42 = vld [vmem:[%s0 + $0xa4] sm:$0xf]
  %v43 = vld [vmem:[%s0 + $0xa8] sm:$0xff]
  %v44 = vld [vmem:[%s0 + $0xb0] sm:$0xf]
  %v45 = vld [vmem:[%s0 + $0xb4] sm:$0xff]
  %v46 = vld [vmem:[%s0 + $0xbc] sm:$0xf]
  %v47 = vld [vmem:[%s0 + $0xc0] sm:$0xff]
  %v48 = vld [vmem:[%s0 + $0xc8] sm:$0xf]
  %v49 = vld [vmem:[%s0 + $0xcc] sm:$0xff]
  %v50 = vld [vmem:[%s0 + $0xd4] sm:$0xf]
  %v51 = vld [vmem:[%s0 + $0xd8] sm:$0xff]
  %v52 = vld [vmem:[%s0 + $0xe0] sm:$0xf]
  %v53 = vld [vmem:[%s0 + $0xe4] sm:$0xff]
  %v54 = vld [vmem:[%s0 + $0xec] sm:$0xf]
  %v55 = vld [vmem:[%s0 + $0xf0] sm:$0xff]
  %v56 = vld [vmem:[%s0 + $0xf8] sm:$0xf]
  %v57 = vld [vmem:[%s0 + $0xfc] sm:$0xff]
  %v58 = vld [vmem:[%s0 + $0x104] sm:$0xf]
  %v59 = vld [vmem:[%s0 + $0x108] sm:$0xff]
  %v60 = vld [vmem:[%s0 + $0x110] sm:$0xf]
  %v61 = vld [vmem:[%s0 + $0x114] sm:$0xff]
  %v62 = vld [vmem:[%s0 + $0x11c] sm:$0xf]
  %v63 = vld [vmem:[%s0 + $0x120] sm:$0xff]
  %v64 = vld [vmem:[%s0 + $0x128] sm:$0xf]
  %v65 = vld [vmem:[%s0 + $0x12c] sm:$0xff]
  %v66 = vld [vmem:[%s0 + $0x134] sm:$0xf]
  %v67 = vld [vmem:[%s0 + $0x138] sm:$0xff]
  %v68 = vld [vmem:[%s0 + $0x140] sm:$0xf]
  %v69 = vld [vmem:[%s0 + $0x144] sm:$0xff]
  %v70 = vld [vmem:[%s0 + $0x14c] sm:$0xf]
  %v71 = vld [vmem:[%s0 + $0x150] sm:$0xff]
  %v72 = vld [vmem:[%s0 + $0x158] sm:$0xf]
  %v73 = vld [vmem:[%s0 + $0x15c] sm:$0xff]
  %v74 = vld [vmem:[%s0 + $0x164] sm:$0xf]
  %v75 = vld [vmem:[%s0 + $0x168] sm:$0xff]
  %v76 = vld [vmem:[%s0 + $0x170] sm:$0xf]
  %v77 = vld [vmem:[%s0 + $0x174] sm:$0xff]
  %v78 = vld [vmem:[%s0 + $0x17c] sm:$0xf]
  %v79 = vld [vmem:[%s0 + $0x180] sm:$0xff]
  %v80 = vld [vmem:[%s0 + $0x188] sm:$0xf]
  %v81 = vld [vmem:[%s0 + $0x18c] sm:$0xff]
  %v82 = vld [vmem:[%s0 + $0x194] sm:$0xf]
  %v83 = vld [vmem:[%s0 + $0x198] sm:$0xff]
  %v84 = vld [vmem:[%s0 + $0x1a0] sm:$0xf]
  %v85 = vld [vmem:[%s0 + $0x1a4] sm:$0xff]
  %v86 = vld [vmem:[%s0 + $0x1ac] sm:$0xf]
  %v87 = vld [vmem:[%s0 + $0x1b0] sm:$0xff]
  %v88 = vld [vmem:[%s0 + $0x1b8] sm:$0xf]
  %v89 = vld [vmem:[%s0 + $0x1bc] sm:$0xff]
  %v90 = vld [vmem:[%s0 + $0x1c4] sm:$0xf]
  %v91 = vld [vmem:[%s0 + $0x1c8] sm:$0xff]
  %v92 = vld [vmem:[%s0 + $0x1d0] sm:$0xf]
  %v93 = vld [vmem:[%s0 + $0x1d4] sm:$0xff]
  %v94 = vld [vmem:[%s0 + $0x1dc] sm:$0xf]
  %v95 = vld [vmem:[%s0 + $0x1e0] sm:$0xff]
  %v96 = vld [vmem:[%s0 + $0x1e8] sm:$0xf]
  %v97 = vld [vmem:[%s0 + $0x1ec] sm:$0xff]
  %v98 = vld [vmem:[%s0 + $0x1f4] sm:$0xf]
  %v99 = vld [vmem:[%s0 + $0x1f8] sm:$0xff]
  %v100 = vld [vmem:[%s0 + $0x200] sm:$0xf]
  %v101 = vld [vmem:[%s0 + $0x204] sm:$0xff]
  %v102 = vld [vmem:[%s0 + $0x20c] sm:$0xf]
  %v103 = vld [vmem:[%s0 + $0x210] sm:$0xff]
  %v104 = vld [vmem:[%s0 + $0x218] sm:$0xf]
  %v105 = vld [vmem:[%s0 + $0x21c] sm:$0xff]
  %v106 = vld [vmem:[%s0 + $0x224] sm:$0xf]
  %v107 = vld [vmem:[%s0 + $0x228] sm:$0xff]
  %v108 = vld [vmem:[%s0 + $0x230] sm:$0xf]
  %v109 = vld [vmem:[%s0 + $0x234] sm:$0xff]
  %v110 = vld [vmem:[%s0 + $0x23c] sm:$0xf]
  %v111 = vld [vmem:[%s0 + $0x240] sm:$0xff]
  %v112 = vld [vmem:[%s0 + $0x248] sm:$0xf]
  %v113 = vld [vmem:[%s0 + $0x24c] sm:$0xff]
  %v114 = vld [vmem:[%s0 + $0x254] sm:$0xf]
  %v115 = vld [vmem:[%s0 + $0x258] sm:$0xff]
  %v116 = vld [vmem:[%s0 + $0x260] sm:$0xf]
  %v117 = vld [vmem:[%s0 + $0x264] sm:$0xff]
  %v118 = vld [vmem:[%s0 + $0x26c] sm:$0xf]
  %v119 = vld [vmem:[%s0 + $0x270] sm:$0xff]
  %v120 = vld [vmem:[%s0 + $0x278] sm:$0xf]
  %v121 = vld [vmem:[%s0 + $0x27c] sm:$0xff]
  %v122 = vld [vmem:[%s0 + $0x284] sm:$0xf]
  %v123 = vld [vmem:[%s0 + $0x288] sm:$0xff]
  %v124 = vld [vmem:[%s0 + $0x290] sm:$0xf]
  %v125 = vld [vmem:[%s0 + $0x294] sm:$0xff]
  %v126 = vld [vmem:[%s0 + $0x29c] sm:$0xf]
  %v127 = vld [vmem:[%s0 + $0x2a0] sm:$0xff]
  %v128 = vld [vmem:[%s0 + $0x2a8] sm:$0xf]
  %v129 = vld [vmem:[%s0 + $0x2ac] sm:$0xff]
  %v130 = vld [vmem:[%s0 + $0x2b4] sm:$0xf]
  %v131 = vld [vmem:[%s0 + $0x2b8] sm:$0xff]
  %v132 = vld [vmem:[%s0 + $0x2c0] sm:$0xf]
  %v133 = vld [vmem:[%s0 + $0x2c4] sm:$0xff]
  %v134 = vld [vmem:[%s0 + $0x2cc] sm:$0xf]
  %v135 = vld [vmem:[%s0 + $0x2d0] sm:$0xff]
  %v136 = vld [vmem:[%s0 + $0x2d8] sm:$0xf]
  %v137 = vld [vmem:[%s0 + $0x2dc] sm:$0xff]
  %v138 = vld [vmem:[%s0 + $0x2e4] sm:$0xf]
  %v139 = vld [vmem:[%s0 + $0x2e8] sm:$0xff]
  %v140 = vld [vmem:[%s0 + $0x2f0] sm:$0xf]
  %v141 = vld [vmem:[%s0 + $0x2f4] sm:$0xff]
  %v142 = vld [vmem:[%s0 + $0x2fc] sm:$0xf]
  %v143 = vld [vmem:[%s1] sm:$0xf]
  %v144 = vld [vmem:[%s1 + $0x4] sm:$0xf]
  %v145 = vld [vmem:[%s1 + $0x8] sm:$0xf]
  %v146 = vld [vmem:[%s1 + $0xc] sm:$0xf]
  %v147 = vld [vmem:[%s1 + $0x10] sm:$0xf]
  %v148 = vld [vmem:[%s1 + $0x14] sm:$0xf]
  %v149 = vld [vmem:[%s1 + $0x18] sm:$0xf]
  %v150 = vld [vmem:[%s1 + $0x1c] sm:$0xf]
  %v151 = vld [vmem:[%s1 + $0x20] sm:$0xf]
  %v152 = vld [vmem:[%s1 + $0x24] sm:$0xf]
  %v153 = vld [vmem:[%s1 + $0x28] sm:$0xf]
  %v154 = vld [vmem:[%s1 + $0x2c] sm:$0xf]
  %v155 = vld [vmem:[%s1 + $0x30] sm:$0xf]
  %v156 = vld [vmem:[%s1 + $0x34] sm:$0xf]
  %v157 = vld [vmem:[%s1 + $0x38] sm:$0xf]
  %v158 = vld [vmem:[%s1 + $0x3c] sm:$0xf]
  %v159 = vld [vmem:[%s1 + $0x40] sm:$0xf]
  %v160 = vld [vmem:[%s1 + $0x44] sm:$0xf]
  %v161 = vld [vmem:[%s1 + $0x48] sm:$0xf]
  %v162 = vld [vmem:[%s1 + $0x4c] sm:$0xf]
  %v163 = vld [vmem:[%s1 + $0x50] sm:$0xf]
  %v164 = vld [vmem:[%s1 + $0x54] sm:$0xf]
  %v165 = vld [vmem:[%s1 + $0x58] sm:$0xf]
  %v166 = vld [vmem:[%s1 + $0x5c] sm:$0xf]
  %v167 = vld [vmem:[%s1 + $0x60] sm:$0xf]
  %v168 = vld [vmem:[%s1 + $0x64] sm:$0xf]
  %v169 = vld [vmem:[%s1 + $0x68] sm:$0xf]
  %v170 = vld [vmem:[%s1 + $0x6c] sm:$0xf]
  %v171 = vld [vmem:[%s1 + $0x70] sm:$0xf]
  %v172 = vld [vmem:[%s1 + $0x74] sm:$0xf]
  %v173 = vld [vmem:[%s1 + $0x78] sm:$0xf]
  %v174 = vld [vmem:[%s1 + $0x7c] sm:$0xf]
  %v175 = vld [vmem:[%s1 + $0x80] sm:$0xf]
  %v176 = vld [vmem:[%s1 + $0x84] sm:$0xf]
  %v177 = vld [vmem:[%s1 + $0x88] sm:$0xf]
  %v178 = vld [vmem:[%s1 + $0x8c] sm:$0xf]
  %v179 = vld [vmem:[%s2] sm:$0x1]
  %v181 = vlaneseq
  %v182 = vshrl.u32 %v181, 7
  %v183 = vsub.s32 0, %v182
  %v184 = vrot.slane %v179, %v183
  %v314 = vunpack.c.l.b16 %v15
  %v315 = vunpack.c.h.b16 %v15
  %v316 = vunpack.c.l.b16 %v16
  %v317 = vunpack.c.l.b16 %v17
  %v318 = vunpack.c.h.b16 %v17
  %v319 = vunpack.c.l.b16 %v18
  %v320 = vunpack.c.l.b16 %v19
  %v321 = vunpack.c.h.b16 %v19
  %v322 = vunpack.c.l.b16 %v20
  %v323 = vunpack.c.l.b16 %v21
  %v324 = vunpack.c.h.b16 %v21
  %v325 = vunpack.c.l.b16 %v22
  %v326 = vunpack.c.l.b16 %v23
  %v327 = vunpack.c.h.b16 %v23
  %v328 = vunpack.c.l.b16 %v24
  %v329 = vunpack.c.l.b16 %v25
  %v330 = vunpack.c.h.b16 %v25
  %v331 = vunpack.c.l.b16 %v26
  %v332 = vunpack.c.l.b16 %v27
  %v333 = vunpack.c.h.b16 %v27
  %v334 = vunpack.c.l.b16 %v28
  %v335 = vunpack.c.l.b16 %v29
  %v336 = vunpack.c.h.b16 %v29
  %v337 = vunpack.c.l.b16 %v30
  %v338 = vunpack.c.l.b16 %v31
  %v339 = vunpack.c.h.b16 %v31
  %v340 = vunpack.c.l.b16 %v32
  %v341 = vunpack.c.l.b16 %v33
  %v342 = vunpack.c.h.b16 %v33
  %v343 = vunpack.c.l.b16 %v34
  %v344 = vunpack.c.l.b16 %v35
  %v345 = vunpack.c.h.b16 %v35
  %v346 = vunpack.c.l.b16 %v36
  %v347 = vunpack.c.l.b16 %v37
  %v348 = vunpack.c.h.b16 %v37
  %v349 = vunpack.c.l.b16 %v38
  %v350 = vunpack.c.l.b16 %v39
  %v351 = vunpack.c.h.b16 %v39
  %v352 = vunpack.c.l.b16 %v40
  %v353 = vunpack.c.l.b16 %v41
  %v354 = vunpack.c.h.b16 %v41
  %v355 = vunpack.c.l.b16 %v42
  %v356 = vunpack.c.l.b16 %v43
  %v357 = vunpack.c.h.b16 %v43
  %v358 = vunpack.c.l.b16 %v44
  %v359 = vunpack.c.l.b16 %v45
  %v360 = vunpack.c.h.b16 %v45
  %v361 = vunpack.c.l.b16 %v46
  %v362 = vunpack.c.l.b16 %v47
  %v363 = vunpack.c.h.b16 %v47
  %v364 = vunpack.c.l.b16 %v48
  %v365 = vunpack.c.l.b16 %v49
  %v366 = vunpack.c.h.b16 %v49
  %v367 = vunpack.c.l.b16 %v50
  %v368 = vunpack.c.l.b16 %v51
  %v369 = vunpack.c.h.b16 %v51
  %v370 = vunpack.c.l.b16 %v52
  %v371 = vunpack.c.l.b16 %v53
  %v372 = vunpack.c.h.b16 %v53
  %v373 = vunpack.c.l.b16 %v54
  %v374 = vunpack.c.l.b16 %v55
  %v375 = vunpack.c.h.b16 %v55
  %v376 = vunpack.c.l.b16 %v56
  %v377 = vunpack.c.l.b16 %v57
  %v378 = vunpack.c.h.b16 %v57
  %v379 = vunpack.c.l.b16 %v58
  %v380 = vunpack.c.l.b16 %v59
  %v381 = vunpack.c.h.b16 %v59
  %v382 = vunpack.c.l.b16 %v60
  %v383 = vunpack.c.l.b16 %v61
  %v384 = vunpack.c.h.b16 %v61
  %v385 = vunpack.c.l.b16 %v62
  %v386 = vunpack.c.l.b16 %v63
  %v387 = vunpack.c.h.b16 %v63
  %v388 = vunpack.c.l.b16 %v64
  %v389 = vunpack.c.l.b16 %v65
  %v390 = vunpack.c.h.b16 %v65
  %v391 = vunpack.c.l.b16 %v66
  %v392 = vunpack.c.l.b16 %v67
  %v393 = vunpack.c.h.b16 %v67
  %v394 = vunpack.c.l.b16 %v68
  %v395 = vunpack.c.l.b16 %v69
  %v396 = vunpack.c.h.b16 %v69
  %v397 = vunpack.c.l.b16 %v70
  %v398 = vunpack.c.l.b16 %v71
  %v399 = vunpack.c.h.b16 %v71
  %v400 = vunpack.c.l.b16 %v72
  %v401 = vunpack.c.l.b16 %v73
  %v402 = vunpack.c.h.b16 %v73
  %v403 = vunpack.c.l.b16 %v74
  %v404 = vunpack.c.l.b16 %v75
  %v405 = vunpack.c.h.b16 %v75
  %v406 = vunpack.c.l.b16 %v76
  %v407 = vunpack.c.l.b16 %v77
  %v408 = vunpack.c.h.b16 %v77
  %v409 = vunpack.c.l.b16 %v78
  %v410 = vunpack.c.l.b16 %v79
  %v411 = vunpack.c.h.b16 %v79
  %v412 = vunpack.c.l.b16 %v80
  %v413 = vunpack.c.l.b16 %v81
  %v414 = vunpack.c.h.b16 %v81
  %v415 = vunpack.c.l.b16 %v82
  %v416 = vunpack.c.l.b16 %v83
  %v417 = vunpack.c.h.b16 %v83
  %v418 = vunpack.c.l.b16 %v84
  %v419 = vunpack.c.l.b16 %v85
  %v420 = vunpack.c.h.b16 %v85
  %v421 = vunpack.c.l.b16 %v86
  %v422 = vunpack.c.l.b16 %v87
  %v423 = vunpack.c.h.b16 %v87
  %v424 = vunpack.c.l.b16 %v88
  %v425 = vunpack.c.l.b16 %v89
  %v426 = vunpack.c.h.b16 %v89
  %v427 = vunpack.c.l.b16 %v90
  %v428 = vunpack.c.l.b16 %v91
  %v429 = vunpack.c.h.b16 %v91
  %v430 = vunpack.c.l.b16 %v92
  %v431 = vunpack.c.l.b16 %v93
  %v432 = vunpack.c.h.b16 %v93
  %v433 = vunpack.c.l.b16 %v94
  %v434 = vunpack.c.l.b16 %v95
  %v435 = vunpack.c.h.b16 %v95
  %v436 = vunpack.c.l.b16 %v96
  %v437 = vunpack.c.l.b16 %v97
  %v438 = vunpack.c.h.b16 %v97
  %v439 = vunpack.c.l.b16 %v98
  %v440 = vunpack.c.l.b16 %v99
  %v441 = vunpack.c.h.b16 %v99
  %v442 = vunpack.c.l.b16 %v100
  %v443 = vunpack.c.l.b16 %v101
  %v444 = vunpack.c.h.b16 %v101
  %v445 = vunpack.c.l.b16 %v102
  %v446 = vunpack.c.l.b16 %v103
  %v447 = vunpack.c.h.b16 %v103
  %v448 = vunpack.c.l.b16 %v104
  %v449 = vunpack.c.l.b16 %v105
  %v450 = vunpack.c.h.b16 %v105
  %v451 = vunpack.c.l.b16 %v106
  %v452 = vunpack.c.l.b16 %v107
  %v453 = vunpack.c.h.b16 %v107
  %v454 = vunpack.c.l.b16 %v108
  %v455 = vunpack.c.l.b16 %v109
  %v456 = vunpack.c.h.b16 %v109
  %v457 = vunpack.c.l.b16 %v110
  %v458 = vunpack.c.l.b16 %v111
  %v459 = vunpack.c.h.b16 %v111
  %v460 = vunpack.c.l.b16 %v112
  %v461 = vunpack.c.l.b16 %v113
  %v462 = vunpack.c.h.b16 %v113
  %v463 = vunpack.c.l.b16 %v114
  %v464 = vunpack.c.l.b16 %v115
  %v465 = vunpack.c.h.b16 %v115
  %v466 = vunpack.c.l.b16 %v116
  %v467 = vunpack.c.l.b16 %v117
  %v468 = vunpack.c.h.b16 %v117
  %v469 = vunpack.c.l.b16 %v118
  %v470 = vunpack.c.l.b16 %v119
  %v471 = vunpack.c.h.b16 %v119
  %v472 = vunpack.c.l.b16 %v120
  %v473 = vunpack.c.l.b16 %v121
  %v474 = vunpack.c.h.b16 %v121
  %v475 = vunpack.c.l.b16 %v122
  %v476 = vunpack.c.l.b16 %v123
  %v477 = vunpack.c.h.b16 %v123
  %v478 = vunpack.c.l.b16 %v124
  %v479 = vunpack.c.l.b16 %v125
  %v480 = vunpack.c.h.b16 %v125
  %v481 = vunpack.c.l.b16 %v126
  %v482 = vunpack.c.l.b16 %v127
  %v483 = vunpack.c.h.b16 %v127
  %v484 = vunpack.c.l.b16 %v128
  %v485 = vunpack.c.l.b16 %v129
  %v486 = vunpack.c.h.b16 %v129
  %v487 = vunpack.c.l.b16 %v130
  %v488 = vunpack.c.l.b16 %v131
  %v489 = vunpack.c.h.b16 %v131
  %v490 = vunpack.c.l.b16 %v132
  %v491 = vunpack.c.l.b16 %v133
  %v492 = vunpack.c.h.b16 %v133
  %v493 = vunpack.c.l.b16 %v134
  %v494 = vunpack.c.l.b16 %v135
  %v495 = vunpack.c.h.b16 %v135
  %v496 = vunpack.c.l.b16 %v136
  %v497 = vunpack.c.l.b16 %v137
  %v498 = vunpack.c.h.b16 %v137
  %v499 = vunpack.c.l.b16 %v138
  %v500 = vunpack.c.l.b16 %v139
  %v501 = vunpack.c.h.b16 %v139
  %v502 = vunpack.c.l.b16 %v140
  %v503 = vunpack.c.l.b16 %v141
  %v504 = vunpack.c.h.b16 %v141
  %v505 = vunpack.c.l.b16 %v142
  %v506 = vpack.c.b16 %v317, %v314
  %v507 = vpack.c.b16 %v318, %v315
  %v508 = vpack.c.b16 %v319, %v316
  %v509 = vpack.c.b16 %v323, %v320
  %v510 = vpack.c.b16 %v324, %v321
  %v511 = vpack.c.b16 %v325, %v322
  %v512 = vpack.c.b16 %v329, %v326
  %v513 = vpack.c.b16 %v330, %v327
  %v514 = vpack.c.b16 %v331, %v328
  %v515 = vpack.c.b16 %v335, %v332
  %v516 = vpack.c.b16 %v336, %v333
  %v517 = vpack.c.b16 %v337, %v334
  %v518 = vpack.c.b16 %v341, %v338
  %v519 = vpack.c.b16 %v342, %v339
  %v520 = vpack.c.b16 %v343, %v340
  %v521 = vpack.c.b16 %v347, %v344
  %v522 = vpack.c.b16 %v348, %v345
  %v523 = vpack.c.b16 %v349, %v346
  %v524 = vpack.c.b16 %v353, %v350
  %v525 = vpack.c.b16 %v354, %v351
  %v526 = vpack.c.b16 %v355, %v352
  %v527 = vpack.c.b16 %v359, %v356
  %v528 = vpack.c.b16 %v360, %v357
  %v529 = vpack.c.b16 %v361, %v358
  %v530 = vpack.c.b16 %v365, %v362
  %v531 = vpack.c.b16 %v366, %v363
  %v532 = vpack.c.b16 %v367, %v364
  %v533 = vpack.c.b16 %v371, %v368
  %v534 = vpack.c.b16 %v372, %v369
  %v535 = vpack.c.b16 %v373, %v370
  %v536 = vpack.c.b16 %v377, %v374
  %v537 = vpack.c.b16 %v378, %v375
  %v538 = vpack.c.b16 %v379, %v376
  %v539 = vpack.c.b16 %v383, %v380
  %v540 = vpack.c.b16 %v384, %v381
  %v541 = vpack.c.b16 %v385, %v382
  %v542 = vpack.c.b16 %v389, %v386
  %v543 = vpack.c.b16 %v390, %v387
  %v544 = vpack.c.b16 %v391, %v388
  %v545 = vpack.c.b16 %v395, %v392
  %v546 = vpack.c.b16 %v396, %v393
  %v547 = vpack.c.b16 %v397, %v394
  %v548 = vpack.c.b16 %v401, %v398
  %v549 = vpack.c.b16 %v402, %v399
  %v550 = vpack.c.b16 %v403, %v400
  %v551 = vpack.c.b16 %v407, %v404
  %v552 = vpack.c.b16 %v408, %v405
  %v553 = vpack.c.b16 %v409, %v406
  %v554 = vpack.c.b16 %v413, %v410
  %v555 = vpack.c.b16 %v414, %v411
  %v556 = vpack.c.b16 %v415, %v412
  %v557 = vpack.c.b16 %v419, %v416
  %v558 = vpack.c.b16 %v420, %v417
  %v559 = vpack.c.b16 %v421, %v418
  %v560 = vpack.c.b16 %v425, %v422
  %v561 = vpack.c.b16 %v426, %v423
  %v562 = vpack.c.b16 %v427, %v424
  %v563 = vpack.c.b16 %v431, %v428
  %v564 = vpack.c.b16 %v432, %v429
  %v565 = vpack.c.b16 %v433, %v430
  %v566 = vpack.c.b16 %v437, %v434
  %v567 = vpack.c.b16 %v438, %v435
  %v568 = vpack.c.b16 %v439, %v436
  %v569 = vpack.c.b16 %v443, %v440
  %v570 = vpack.c.b16 %v444, %v441
  %v571 = vpack.c.b16 %v445, %v442
  %v572 = vpack.c.b16 %v449, %v446
  %v573 = vpack.c.b16 %v450, %v447
  %v574 = vpack.c.b16 %v451, %v448
  %v575 = vpack.c.b16 %v455, %v452
  %v576 = vpack.c.b16 %v456, %v453
  %v577 = vpack.c.b16 %v457, %v454
  %v578 = vpack.c.b16 %v461, %v458
  %v579 = vpack.c.b16 %v462, %v459
  %v580 = vpack.c.b16 %v463, %v460
  %v581 = vpack.c.b16 %v467, %v464
  %v582 = vpack.c.b16 %v468, %v465
  %v583 = vpack.c.b16 %v469, %v466
  %v584 = vpack.c.b16 %v473, %v470
  %v585 = vpack.c.b16 %v474, %v471
  %v586 = vpack.c.b16 %v475, %v472
  %v587 = vpack.c.b16 %v479, %v476
  %v588 = vpack.c.b16 %v480, %v477
  %v589 = vpack.c.b16 %v481, %v478
  %v590 = vpack.c.b16 %v485, %v482
  %v591 = vpack.c.b16 %v486, %v483
  %v592 = vpack.c.b16 %v487, %v484
  %v593 = vpack.c.b16 %v491, %v488
  %v594 = vpack.c.b16 %v492, %v489
  %v595 = vpack.c.b16 %v493, %v490
  %v596 = vpack.c.b16 %v497, %v494
  %v597 = vpack.c.b16 %v498, %v495
  %v598 = vpack.c.b16 %v499, %v496
  %v599 = vpack.c.b16 %v503, %v500
  %v600 = vpack.c.b16 %v504, %v501
  %v601 = vpack.c.b16 %v505, %v502
  %v702 = vunpack.c.l.b16 %v143
  %v703 = vunpack.c.l.b16 %v144
  %v704 = vunpack.c.l.b16 %v145
  %v705 = vunpack.c.l.b16 %v146
  %v706 = vunpack.c.l.b16 %v147
  %v707 = vunpack.c.l.b16 %v148
  %v708 = vunpack.c.l.b16 %v149
  %v709 = vunpack.c.l.b16 %v150
  %v710 = vunpack.c.l.b16 %v151
  %v711 = vunpack.c.l.b16 %v152
  %v712 = vunpack.c.l.b16 %v153
  %v713 = vunpack.c.l.b16 %v154
  %v714 = vunpack.c.l.b16 %v155
  %v715 = vunpack.c.l.b16 %v156
  %v716 = vunpack.c.l.b16 %v157
  %v717 = vunpack.c.l.b16 %v158
  %v718 = vunpack.c.l.b16 %v159
  %v719 = vunpack.c.l.b16 %v160
  %v720 = vunpack.c.l.b16 %v161
  %v721 = vunpack.c.l.b16 %v162
  %v722 = vunpack.c.l.b16 %v163
  %v723 = vunpack.c.l.b16 %v164
  %v724 = vunpack.c.l.b16 %v165
  %v725 = vunpack.c.l.b16 %v166
  %v726 = vunpack.c.l.b16 %v167
  %v727 = vunpack.c.l.b16 %v168
  %v728 = vunpack.c.l.b16 %v169
  %v729 = vunpack.c.l.b16 %v170
  %v730 = vunpack.c.l.b16 %v171
  %v731 = vunpack.c.l.b16 %v172
  %v732 = vunpack.c.l.b16 %v173
  %v733 = vunpack.c.l.b16 %v174
  %v734 = vunpack.c.l.b16 %v175
  %v735 = vunpack.c.l.b16 %v176
  %v736 = vunpack.c.l.b16 %v177
  %v737 = vunpack.c.l.b16 %v178
  %v738 = vpack.c.b16 %v703, %v702
  %v739 = vpack.c.b16 %v705, %v704
  %v740 = vpack.c.b16 %v707, %v706
  %v741 = vpack.c.b16 %v709, %v708
  %v742 = vpack.c.b16 %v711, %v710
  %v743 = vpack.c.b16 %v713, %v712
  %v744 = vpack.c.b16 %v715, %v714
  %v745 = vpack.c.b16 %v717, %v716
  %v746 = vpack.c.b16 %v719, %v718
  %v747 = vpack.c.b16 %v721, %v720
  %v748 = vpack.c.b16 %v723, %v722
  %v749 = vpack.c.b16 %v725, %v724
  %v750 = vpack.c.b16 %v727, %v726
  %v751 = vpack.c.b16 %v729, %v728
  %v752 = vpack.c.b16 %v731, %v730
  %v753 = vpack.c.b16 %v733, %v732
  %v754 = vpack.c.b16 %v735, %v734
  %v755 = vpack.c.b16 %v737, %v736
  %vm774 = vcmask 261120
  %v776 = vsel %vm774, %v508, 0
  %v779 = vsel %vm774, %v511, 0
  %v782 = vsel %vm774, %v514, 0
  %v785 = vsel %vm774, %v517, 0
  %v788 = vsel %vm774, %v520, 0
  %v791 = vsel %vm774, %v523, 0
  %v794 = vsel %vm774, %v526, 0
  %v797 = vsel %vm774, %v529, 0
  %v800 = vsel %vm774, %v532, 0
  %v803 = vsel %vm774, %v535, 0
  %v806 = vsel %vm774, %v538, 0
  %v809 = vsel %vm774, %v541, 0
  %v812 = vsel %vm774, %v544, 0
  %v815 = vsel %vm774, %v547, 0
  %v818 = vsel %vm774, %v550, 0
  %v821 = vsel %vm774, %v553, 0
  %v824 = vsel %vm774, %v556, 0
  %v827 = vsel %vm774, %v559, 0
  %v830 = vsel %vm774, %v562, 0
  %v833 = vsel %vm774, %v565, 0
  %v836 = vsel %vm774, %v568, 0
  %v839 = vsel %vm774, %v571, 0
  %v842 = vsel %vm774, %v574, 0
  %v845 = vsel %vm774, %v577, 0
  %v848 = vsel %vm774, %v580, 0
  %v851 = vsel %vm774, %v583, 0
  %v854 = vsel %vm774, %v586, 0
  %v857 = vsel %vm774, %v589, 0
  %v860 = vsel %vm774, %v592, 0
  %v863 = vsel %vm774, %v595, 0
  %v866 = vsel %vm774, %v598, 0
  %v869 = vsel %vm774, %v601, 0
  %871 = vmatprep.subr.bf16.mxu0 0
  %872 = vmatpush1.bf16.msra.mxu0 %v745
  %873 = vmatprep.subr.bf16.mxu0 0
  %874 = vmatpush1.bf16.msra.mxu0 %v744
  %875 = vmatprep.subr.bf16.mxu0 0
  %876 = vmatpush1.bf16.msra.mxu0 %v743
  %877 = vmatprep.subr.bf16.mxu0 0
  %878 = vmatpush1.bf16.msra.mxu0 %v742
  %879 = vmatprep.subr.bf16.mxu0 0
  %880 = vmatpush1.bf16.msra.mxu0 %v741
  %881 = vmatprep.subr.bf16.mxu0 0
  %882 = vmatpush1.bf16.msra.mxu0 %v740
  %883 = vmatprep.subr.bf16.mxu0 0
  %884 = vmatpush1.bf16.msra.mxu0 %v739
  %885 = vmatprep.subr.bf16.mxu0 0
  %886 = vmatpush1.bf16.msra.mxu0 %v738
  %887 = vmatprep.subr.bf16.mxu0 0
  %888 = vmatpush2.bf16.msra.mxu0 %v753
  %889 = vmatprep.subr.bf16.mxu0 0
  %890 = vmatpush2.bf16.msra.mxu0 %v752
  %891 = vmatprep.subr.bf16.mxu0 0
  %892 = vmatpush2.bf16.msra.mxu0 %v751
  %893 = vmatprep.subr.bf16.mxu0 0
  %894 = vmatpush2.bf16.msra.mxu0 %v750
  %895 = vmatprep.subr.bf16.mxu0 0
  %896 = vmatpush2.bf16.msra.mxu0 %v749
  %897 = vmatprep.subr.bf16.mxu0 0
  %898 = vmatpush2.bf16.msra.mxu0 %v748
  %899 = vmatprep.subr.bf16.mxu0 0
  %900 = vmatpush2.bf16.msra.mxu0 %v747
  %901 = vmatprep.subr.bf16.mxu0 0
  %902 = vmatpush2.bf16.msra.mxu0 %v746
  %903 = vmatprep.mubr.bf16.mxu0 %v507
  %904 = vmatmul.mubr.bf16.gmra.mxu0 %v506
  %v905 = vpop.f32.mrf.mxu0
  %v906 = vadd.f32 %v184, %v905
  %v907 = vpop.f32.mrf.mxu0
  %v908 = vpop.f32.mrf.mxu0
  %v909 = vadd.f32 %v184, %v908
  %v910 = vpop.f32.mrf.mxu0
  %911 = vmatprep.mubr.bf16.mxu0 %v510
  %912 = vmatmul.mubr.bf16.gmra.mxu0 %v509
  %v913 = vpop.f32.mrf.mxu0
  %v914 = vadd.f32 %v184, %v913
  %v915 = vpop.f32.mrf.mxu0
  %v916 = vpop.f32.mrf.mxu0
  %v917 = vadd.f32 %v184, %v916
  %v918 = vpop.f32.mrf.mxu0
  %919 = vmatprep.mubr.bf16.mxu0 %v513
  %920 = vmatmul.mubr.bf16.gmra.mxu0 %v512
  %v921 = vpop.f32.mrf.mxu0
  %v922 = vadd.f32 %v184, %v921
  %v923 = vpop.f32.mrf.mxu0
  %v924 = vpop.f32.mrf.mxu0
  %v925 = vadd.f32 %v184, %v924
  %v926 = vpop.f32.mrf.mxu0
  %927 = vmatprep.mubr.bf16.mxu0 %v516
  %928 = vmatmul.mubr.bf16.gmra.mxu0 %v515
  %v929 = vpop.f32.mrf.mxu0
  %v930 = vadd.f32 %v184, %v929
  %v931 = vpop.f32.mrf.mxu0
  %v932 = vpop.f32.mrf.mxu0
  %v933 = vadd.f32 %v184, %v932
  %v934 = vpop.f32.mrf.mxu0
  %935 = vmatprep.mubr.bf16.mxu0 %v519
  %936 = vmatmul.mubr.bf16.gmra.mxu0 %v518
  %v937 = vpop.f32.mrf.mxu0
  %v938 = vadd.f32 %v184, %v937
  %v939 = vpop.f32.mrf.mxu0
  %v940 = vpop.f32.mrf.mxu0
  %v941 = vadd.f32 %v184, %v940
  %v942 = vpop.f32.mrf.mxu0
  %943 = vmatprep.mubr.bf16.mxu0 %v522
  %944 = vmatmul.mubr.bf16.gmra.mxu0 %v521
  %v945 = vpop.f32.mrf.mxu0
  %v946 = vadd.f32 %v184, %v945
  %v947 = vpop.f32.mrf.mxu0
  %v948 = vpop.f32.mrf.mxu0
  %v949 = vadd.f32 %v184, %v948
  %v950 = vpop.f32.mrf.mxu0
  %951 = vmatprep.mubr.bf16.mxu0 %v525
  %952 = vmatmul.mubr.bf16.gmra.mxu0 %v524
  %v953 = vpop.f32.mrf.mxu0
  %v954 = vadd.f32 %v184, %v953
  %v955 = vpop.f32.mrf.mxu0
  %v956 = vpop.f32.mrf.mxu0
  %v957 = vadd.f32 %v184, %v956
  %v958 = vpop.f32.mrf.mxu0
  %959 = vmatprep.mubr.bf16.mxu0 %v528
  %960 = vmatmul.mubr.bf16.gmra.mxu0 %v527
  %v961 = vpop.f32.mrf.mxu0
  %v962 = vadd.f32 %v184, %v961
  %v963 = vpop.f32.mrf.mxu0
  %v964 = vpop.f32.mrf.mxu0
  %v965 = vadd.f32 %v184, %v964
  %v966 = vpop.f32.mrf.mxu0
  %967 = vmatprep.mubr.bf16.mxu0 %v531
  %968 = vmatmul.mubr.bf16.gmra.mxu0 %v530
  %v969 = vpop.f32.mrf.mxu0
  %v970 = vadd.f32 %v184, %v969
  %v971 = vpop.f32.mrf.mxu0
  %v972 = vpop.f32.mrf.mxu0
  %v973 = vadd.f32 %v184, %v972
  %v974 = vpop.f32.mrf.mxu0
  %975 = vmatprep.mubr.bf16.mxu0 %v534
  %976 = vmatmul.mubr.bf16.gmra.mxu0 %v533
  %v977 = vpop.f32.mrf.mxu0
  %v978 = vadd.f32 %v184, %v977
  %v979 = vpop.f32.mrf.mxu0
  %v980 = vpop.f32.mrf.mxu0
  %v981 = vadd.f32 %v184, %v980
  %v982 = vpop.f32.mrf.mxu0
  %983 = vmatprep.mubr.bf16.mxu0 %v537
  %984 = vmatmul.mubr.bf16.gmra.mxu0 %v536
  %v985 = vpop.f32.mrf.mxu0
  %v986 = vadd.f32 %v184, %v985
  %v987 = vpop.f32.mrf.mxu0
  %v988 = vpop.f32.mrf.mxu0
  %v989 = vadd.f32 %v184, %v988
  %v990 = vpop.f32.mrf.mxu0
  %991 = vmatprep.mubr.bf16.mxu0 %v540
  %992 = vmatmul.mubr.bf16.gmra.mxu0 %v539
  %v993 = vpop.f32.mrf.mxu0
  %v994 = vadd.f32 %v184, %v993
  %v995 = vpop.f32.mrf.mxu0
  %v996 = vpop.f32.mrf.mxu0
  %v997 = vadd.f32 %v184, %v996
  %v998 = vpop.f32.mrf.mxu0
  %999 = vmatprep.mubr.bf16.mxu0 %v543
  %1000 = vmatmul.mubr.bf16.gmra.mxu0 %v542
  %v1001 = vpop.f32.mrf.mxu0
  %v1002 = vadd.f32 %v184, %v1001
  %v1003 = vpop.f32.mrf.mxu0
  %v1004 = vpop.f32.mrf.mxu0
  %v1005 = vadd.f32 %v184, %v1004
  %v1006 = vpop.f32.mrf.mxu0
  %1007 = vmatprep.mubr.bf16.mxu0 %v546
  %1008 = vmatmul.mubr.bf16.gmra.mxu0 %v545
  %v1009 = vpop.f32.mrf.mxu0
  %v1010 = vadd.f32 %v184, %v1009
  %v1011 = vpop.f32.mrf.mxu0
  %v1012 = vpop.f32.mrf.mxu0
  %v1013 = vadd.f32 %v184, %v1012
  %v1014 = vpop.f32.mrf.mxu0
  %1015 = vmatprep.mubr.bf16.mxu0 %v549
  %1016 = vmatmul.mubr.bf16.gmra.mxu0 %v548
  %v1017 = vpop.f32.mrf.mxu0
  %v1018 = vadd.f32 %v184, %v1017
  %v1019 = vpop.f32.mrf.mxu0
  %v1020 = vpop.f32.mrf.mxu0
  %v1021 = vadd.f32 %v184, %v1020
  %v1022 = vpop.f32.mrf.mxu0
  %1023 = vmatprep.mubr.bf16.mxu0 %v552
  %1024 = vmatmul.mubr.bf16.gmra.mxu0 %v551
  %v1025 = vpop.f32.mrf.mxu0
  %v1026 = vadd.f32 %v184, %v1025
  %v1027 = vpop.f32.mrf.mxu0
  %v1028 = vpop.f32.mrf.mxu0
  %v1029 = vadd.f32 %v184, %v1028
  %v1030 = vpop.f32.mrf.mxu0
  %1031 = vmatprep.mubr.bf16.mxu0 %v555
  %1032 = vmatmul.mubr.bf16.gmra.mxu0 %v554
  %v1033 = vpop.f32.mrf.mxu0
  %v1034 = vadd.f32 %v184, %v1033
  %v1035 = vpop.f32.mrf.mxu0
  %v1036 = vpop.f32.mrf.mxu0
  %v1037 = vadd.f32 %v184, %v1036
  %v1038 = vpop.f32.mrf.mxu0
  %1039 = vmatprep.mubr.bf16.mxu0 %v558
  %1040 = vmatmul.mubr.bf16.gmra.mxu0 %v557
  %v1041 = vpop.f32.mrf.mxu0
  %v1042 = vadd.f32 %v184, %v1041
  %v1043 = vpop.f32.mrf.mxu0
  %v1044 = vpop.f32.mrf.mxu0
  %v1045 = vadd.f32 %v184, %v1044
  %v1046 = vpop.f32.mrf.mxu0
  %1047 = vmatprep.mubr.bf16.mxu0 %v561
  %1048 = vmatmul.mubr.bf16.gmra.mxu0 %v560
  %v1049 = vpop.f32.mrf.mxu0
  %v1050 = vadd.f32 %v184, %v1049
  %v1051 = vpop.f32.mrf.mxu0
  %v1052 = vpop.f32.mrf.mxu0
  %v1053 = vadd.f32 %v184, %v1052
  %v1054 = vpop.f32.mrf.mxu0
  %1055 = vmatprep.mubr.bf16.mxu0 %v564
  %1056 = vmatmul.mubr.bf16.gmra.mxu0 %v563
  %v1057 = vpop.f32.mrf.mxu0
  %v1058 = vadd.f32 %v184, %v1057
  %v1059 = vpop.f32.mrf.mxu0
  %v1060 = vpop.f32.mrf.mxu0
  %v1061 = vadd.f32 %v184, %v1060
  %v1062 = vpop.f32.mrf.mxu0
  %1063 = vmatprep.mubr.bf16.mxu0 %v567
  %1064 = vmatmul.mubr.bf16.gmra.mxu0 %v566
  %v1065 = vpop.f32.mrf.mxu0
  %v1066 = vadd.f32 %v184, %v1065
  %v1067 = vpop.f32.mrf.mxu0
  %v1068 = vpop.f32.mrf.mxu0
  %v1069 = vadd.f32 %v184, %v1068
  %v1070 = vpop.f32.mrf.mxu0
  %1071 = vmatprep.mubr.bf16.mxu0 %v570
  %1072 = vmatmul.mubr.bf16.gmra.mxu0 %v569
  %v1073 = vpop.f32.mrf.mxu0
  %v1074 = vadd.f32 %v184, %v1073
  %v1075 = vpop.f32.mrf.mxu0
  %v1076 = vpop.f32.mrf.mxu0
  %v1077 = vadd.f32 %v184, %v1076
  %v1078 = vpop.f32.mrf.mxu0
  %1079 = vmatprep.mubr.bf16.mxu0 %v573
  %1080 = vmatmul.mubr.bf16.gmra.mxu0 %v572
  %v1081 = vpop.f32.mrf.mxu0
  %v1082 = vadd.f32 %v184, %v1081
  %v1083 = vpop.f32.mrf.mxu0
  %v1084 = vpop.f32.mrf.mxu0
  %v1085 = vadd.f32 %v184, %v1084
  %v1086 = vpop.f32.mrf.mxu0
  %1087 = vmatprep.mubr.bf16.mxu0 %v576
  %1088 = vmatmul.mubr.bf16.gmra.mxu0 %v575
  %v1089 = vpop.f32.mrf.mxu0
  %v1090 = vadd.f32 %v184, %v1089
  %v1091 = vpop.f32.mrf.mxu0
  %v1092 = vpop.f32.mrf.mxu0
  %v1093 = vadd.f32 %v184, %v1092
  %v1094 = vpop.f32.mrf.mxu0
  %1095 = vmatprep.mubr.bf16.mxu0 %v579
  %1096 = vmatmul.mubr.bf16.gmra.mxu0 %v578
  %v1097 = vpop.f32.mrf.mxu0
  %v1098 = vadd.f32 %v184, %v1097
  %v1099 = vpop.f32.mrf.mxu0
  %v1100 = vpop.f32.mrf.mxu0
  %v1101 = vadd.f32 %v184, %v1100
  %v1102 = vpop.f32.mrf.mxu0
  %1103 = vmatprep.mubr.bf16.mxu0 %v582
  %1104 = vmatmul.mubr.bf16.gmra.mxu0 %v581
  %v1105 = vpop.f32.mrf.mxu0
  %v1106 = vadd.f32 %v184, %v1105
  %v1107 = vpop.f32.mrf.mxu0
  %v1108 = vpop.f32.mrf.mxu0
  %v1109 = vadd.f32 %v184, %v1108
  %v1110 = vpop.f32.mrf.mxu0
  %1111 = vmatprep.mubr.bf16.mxu0 %v585
  %1112 = vmatmul.mubr.bf16.gmra.mxu0 %v584
  %v1113 = vpop.f32.mrf.mxu0
  %v1114 = vadd.f32 %v184, %v1113
  %v1115 = vpop.f32.mrf.mxu0
  %v1116 = vpop.f32.mrf.mxu0
  %v1117 = vadd.f32 %v184, %v1116
  %v1118 = vpop.f32.mrf.mxu0
  %1119 = vmatprep.mubr.bf16.mxu0 %v588
  %1120 = vmatmul.mubr.bf16.gmra.mxu0 %v587
  %v1121 = vpop.f32.mrf.mxu0
  %v1122 = vadd.f32 %v184, %v1121
  %v1123 = vpop.f32.mrf.mxu0
  %v1124 = vpop.f32.mrf.mxu0
  %v1125 = vadd.f32 %v184, %v1124
  %v1126 = vpop.f32.mrf.mxu0
  %1127 = vmatprep.mubr.bf16.mxu0 %v591
  %1128 = vmatmul.mubr.bf16.gmra.mxu0 %v590
  %v1129 = vpop.f32.mrf.mxu0
  %v1130 = vadd.f32 %v184, %v1129
  %v1131 = vpop.f32.mrf.mxu0
  %v1132 = vpop.f32.mrf.mxu0
  %v1133 = vadd.f32 %v184, %v1132
  %v1134 = vpop.f32.mrf.mxu0
  %1135 = vmatprep.mubr.bf16.mxu0 %v594
  %1136 = vmatmul.mubr.bf16.gmra.mxu0 %v593
  %v1137 = vpop.f32.mrf.mxu0
  %v1138 = vadd.f32 %v184, %v1137
  %v1139 = vpop.f32.mrf.mxu0
  %v1140 = vpop.f32.mrf.mxu0
  %v1141 = vadd.f32 %v184, %v1140
  %v1142 = vpop.f32.mrf.mxu0
  %1143 = vmatprep.mubr.bf16.mxu0 %v597
  %1144 = vmatmul.mubr.bf16.gmra.mxu0 %v596
  %v1145 = vpop.f32.mrf.mxu0
  %v1146 = vadd.f32 %v184, %v1145
  %v1147 = vpop.f32.mrf.mxu0
  %v1148 = vpop.f32.mrf.mxu0
  %v1149 = vadd.f32 %v184, %v1148
  %v1150 = vpop.f32.mrf.mxu0
  %1151 = vmatprep.mubr.bf16.mxu0 %v600
  %1152 = vmatmul.mubr.bf16.gmra.mxu0 %v599
  %v1153 = vpop.f32.mrf.mxu0
  %v1154 = vadd.f32 %v184, %v1153
  %v1155 = vpop.f32.mrf.mxu0
  %v1156 = vpop.f32.mrf.mxu0
  %v1157 = vadd.f32 %v184, %v1156
  %v1158 = vpop.f32.mrf.mxu0
  %1159 = vdwg.mxu0
  %1160 = vmatprep.subr.bf16.mxu0 0
  %1161 = vmatpush1.bf16.msra.mxu0 0
  %1162 = vmatprep.subr.bf16.mxu0 0
  %1163 = vmatpush1.bf16.msra.mxu0 0
  %1164 = vmatprep.subr.bf16.mxu0 0
  %1165 = vmatpush1.bf16.msra.mxu0 0
  %1166 = vmatprep.subr.bf16.mxu0 0
  %1167 = vmatpush1.bf16.msra.mxu0 0
  %1168 = vmatprep.subr.bf16.mxu0 0
  %1169 = vmatpush1.bf16.msra.mxu0 0
  %1170 = vmatprep.subr.bf16.mxu0 0
  %1171 = vmatpush1.bf16.msra.mxu0 0
  %1172 = vmatprep.subr.bf16.mxu0 0
  %1173 = vmatpush1.bf16.msra.mxu0 %v755
  %1174 = vmatprep.subr.bf16.mxu0 0
  %1175 = vmatpush1.bf16.msra.mxu0 %v754
  %1176 = vmatprep.subr.bf16.mxu0 0
  %1177 = vmatpush2.bf16.msra.mxu0 0
  %1178 = vmatprep.subr.bf16.mxu0 0
  %1179 = vmatpush2.bf16.msra.mxu0 0
  %1180 = vmatprep.subr.bf16.mxu0 0
  %1181 = vmatpush2.bf16.msra.mxu0 0
  %1182 = vmatprep.subr.bf16.mxu0 0
  %1183 = vmatpush2.bf16.msra.mxu0 0
  %1184 = vmatprep.subr.bf16.mxu0 0
  %1185 = vmatpush2.bf16.msra.mxu0 0
  %1186 = vmatprep.subr.bf16.mxu0 0
  %1187 = vmatpush2.bf16.msra.mxu0 0
  %1188 = vmatprep.subr.bf16.mxu0 0
  %1189 = vmatpush2.bf16.msra.mxu0 0
  %1190 = vmatprep.subr.bf16.mxu0 0
  %1191 = vmatpush2.bf16.msra.mxu0 0
  %1192 = vmatprep.mubr.bf16.mxu0 0
  %1193 = vmatmul.mubr.bf16.gmra.mxu0 %v776
  %v1194 = vpop.f32.mrf.mxu0
  %v1195 = vadd.f32 %v906, %v1194
  %v1196 = vpop.f32.mrf.mxu0
  %v1197 = vpop.f32.mrf.mxu0
  %v1198 = vadd.f32 %v909, %v1197
  %v1199 = vpop.f32.mrf.mxu0
  %1200 = vmatprep.mubr.bf16.mxu0 0
  %1201 = vmatmul.mubr.bf16.gmra.mxu0 %v779
  %v1202 = vpop.f32.mrf.mxu0
  %v1203 = vadd.f32 %v914, %v1202
  %v1204 = vpop.f32.mrf.mxu0
  %v1205 = vpop.f32.mrf.mxu0
  %v1206 = vadd.f32 %v917, %v1205
  %v1207 = vpop.f32.mrf.mxu0
  %1208 = vmatprep.mubr.bf16.mxu0 0
  %1209 = vmatmul.mubr.bf16.gmra.mxu0 %v782
  %v1210 = vpop.f32.mrf.mxu0
  %v1211 = vadd.f32 %v922, %v1210
  %v1212 = vpop.f32.mrf.mxu0
  %v1213 = vpop.f32.mrf.mxu0
  %v1214 = vadd.f32 %v925, %v1213
  %v1215 = vpop.f32.mrf.mxu0
  %1216 = vmatprep.mubr.bf16.mxu0 0
  %1217 = vmatmul.mubr.bf16.gmra.mxu0 %v785
  %v1218 = vpop.f32.mrf.mxu0
  %v1219 = vadd.f32 %v930, %v1218
  %v1220 = vpop.f32.mrf.mxu0
  %v1221 = vpop.f32.mrf.mxu0
  %v1222 = vadd.f32 %v933, %v1221
  %v1223 = vpop.f32.mrf.mxu0
  %1224 = vmatprep.mubr.bf16.mxu0 0
  %1225 = vmatmul.mubr.bf16.gmra.mxu0 %v788
  %v1226 = vpop.f32.mrf.mxu0
  %v1227 = vadd.f32 %v938, %v1226
  %v1228 = vpop.f32.mrf.mxu0
  %v1229 = vpop.f32.mrf.mxu0
  %v1230 = vadd.f32 %v941, %v1229
  %v1231 = vpop.f32.mrf.mxu0
  %1232 = vmatprep.mubr.bf16.mxu0 0
  %1233 = vmatmul.mubr.bf16.gmra.mxu0 %v791
  %v1234 = vpop.f32.mrf.mxu0
  %v1235 = vadd.f32 %v946, %v1234
  %v1236 = vpop.f32.mrf.mxu0
  %v1237 = vpop.f32.mrf.mxu0
  %v1238 = vadd.f32 %v949, %v1237
  %v1239 = vpop.f32.mrf.mxu0
  %1240 = vmatprep.mubr.bf16.mxu0 0
  %1241 = vmatmul.mubr.bf16.gmra.mxu0 %v794
  %v1242 = vpop.f32.mrf.mxu0
  %v1243 = vadd.f32 %v954, %v1242
  %v1244 = vpop.f32.mrf.mxu0
  %v1245 = vpop.f32.mrf.mxu0
  %v1246 = vadd.f32 %v957, %v1245
  %v1247 = vpop.f32.mrf.mxu0
  %1248 = vmatprep.mubr.bf16.mxu0 0
  %1249 = vmatmul.mubr.bf16.gmra.mxu0 %v797
  %v1250 = vpop.f32.mrf.mxu0
  %v1251 = vadd.f32 %v962, %v1250
  %v1252 = vpop.f32.mrf.mxu0
  %v1253 = vpop.f32.mrf.mxu0
  %v1254 = vadd.f32 %v965, %v1253
  %v1255 = vpop.f32.mrf.mxu0
  %1256 = vmatprep.mubr.bf16.mxu0 0
  %1257 = vmatmul.mubr.bf16.gmra.mxu0 %v800
  %v1258 = vpop.f32.mrf.mxu0
  %v1259 = vadd.f32 %v970, %v1258
  %v1260 = vpop.f32.mrf.mxu0
  %v1261 = vpop.f32.mrf.mxu0
  %v1262 = vadd.f32 %v973, %v1261
  %v1263 = vpop.f32.mrf.mxu0
  %1264 = vmatprep.mubr.bf16.mxu0 0
  %1265 = vmatmul.mubr.bf16.gmra.mxu0 %v803
  %v1266 = vpop.f32.mrf.mxu0
  %v1267 = vadd.f32 %v978, %v1266
  %v1268 = vpop.f32.mrf.mxu0
  %v1269 = vpop.f32.mrf.mxu0
  %v1270 = vadd.f32 %v981, %v1269
  %v1271 = vpop.f32.mrf.mxu0
  %1272 = vmatprep.mubr.bf16.mxu0 0
  %1273 = vmatmul.mubr.bf16.gmra.mxu0 %v806
  %v1274 = vpop.f32.mrf.mxu0
  %v1275 = vadd.f32 %v986, %v1274
  %v1276 = vpop.f32.mrf.mxu0
  %v1277 = vpop.f32.mrf.mxu0
  %v1278 = vadd.f32 %v989, %v1277
  %v1279 = vpop.f32.mrf.mxu0
  %1280 = vmatprep.mubr.bf16.mxu0 0
  %1281 = vmatmul.mubr.bf16.gmra.mxu0 %v809
  %v1282 = vpop.f32.mrf.mxu0
  %v1283 = vadd.f32 %v994, %v1282
  %v1284 = vpop.f32.mrf.mxu0
  %v1285 = vpop.f32.mrf.mxu0
  %v1286 = vadd.f32 %v997, %v1285
  %v1287 = vpop.f32.mrf.mxu0
  %1288 = vmatprep.mubr.bf16.mxu0 0
  %1289 = vmatmul.mubr.bf16.gmra.mxu0 %v812
  %v1290 = vpop.f32.mrf.mxu0
  %v1291 = vadd.f32 %v1002, %v1290
  %v1292 = vpop.f32.mrf.mxu0
  %v1293 = vpop.f32.mrf.mxu0
  %v1294 = vadd.f32 %v1005, %v1293
  %v1295 = vpop.f32.mrf.mxu0
  %1296 = vmatprep.mubr.bf16.mxu0 0
  %1297 = vmatmul.mubr.bf16.gmra.mxu0 %v815
  %v1298 = vpop.f32.mrf.mxu0
  %v1299 = vadd.f32 %v1010, %v1298
  %v1300 = vpop.f32.mrf.mxu0
  %v1301 = vpop.f32.mrf.mxu0
  %v1302 = vadd.f32 %v1013, %v1301
  %v1303 = vpop.f32.mrf.mxu0
  %1304 = vmatprep.mubr.bf16.mxu0 0
  %1305 = vmatmul.mubr.bf16.gmra.mxu0 %v818
  %v1306 = vpop.f32.mrf.mxu0
  %v1307 = vadd.f32 %v1018, %v1306
  %v1308 = vpop.f32.mrf.mxu0
  %v1309 = vpop.f32.mrf.mxu0
  %v1310 = vadd.f32 %v1021, %v1309
  %v1311 = vpop.f32.mrf.mxu0
  %1312 = vmatprep.mubr.bf16.mxu0 0
  %1313 = vmatmul.mubr.bf16.gmra.mxu0 %v821
  %v1314 = vpop.f32.mrf.mxu0
  %v1315 = vadd.f32 %v1026, %v1314
  %v1316 = vpop.f32.mrf.mxu0
  %v1317 = vpop.f32.mrf.mxu0
  %v1318 = vadd.f32 %v1029, %v1317
  %v1319 = vpop.f32.mrf.mxu0
  %1320 = vmatprep.mubr.bf16.mxu0 0
  %1321 = vmatmul.mubr.bf16.gmra.mxu0 %v824
  %v1322 = vpop.f32.mrf.mxu0
  %v1323 = vadd.f32 %v1034, %v1322
  %v1324 = vpop.f32.mrf.mxu0
  %v1325 = vpop.f32.mrf.mxu0
  %v1326 = vadd.f32 %v1037, %v1325
  %v1327 = vpop.f32.mrf.mxu0
  %1328 = vmatprep.mubr.bf16.mxu0 0
  %1329 = vmatmul.mubr.bf16.gmra.mxu0 %v827
  %v1330 = vpop.f32.mrf.mxu0
  %v1331 = vadd.f32 %v1042, %v1330
  %v1332 = vpop.f32.mrf.mxu0
  %v1333 = vpop.f32.mrf.mxu0
  %v1334 = vadd.f32 %v1045, %v1333
  %v1335 = vpop.f32.mrf.mxu0
  %1336 = vmatprep.mubr.bf16.mxu0 0
  %1337 = vmatmul.mubr.bf16.gmra.mxu0 %v830
  %v1338 = vpop.f32.mrf.mxu0
  %v1339 = vadd.f32 %v1050, %v1338
  %v1340 = vpop.f32.mrf.mxu0
  %v1341 = vpop.f32.mrf.mxu0
  %v1342 = vadd.f32 %v1053, %v1341
  %v1343 = vpop.f32.mrf.mxu0
  %1344 = vmatprep.mubr.bf16.mxu0 0
  %1345 = vmatmul.mubr.bf16.gmra.mxu0 %v833
  %v1346 = vpop.f32.mrf.mxu0
  %v1347 = vadd.f32 %v1058, %v1346
  %v1348 = vpop.f32.mrf.mxu0
  %v1349 = vpop.f32.mrf.mxu0
  %v1350 = vadd.f32 %v1061, %v1349
  %v1351 = vpop.f32.mrf.mxu0
  %1352 = vmatprep.mubr.bf16.mxu0 0
  %1353 = vmatmul.mubr.bf16.gmra.mxu0 %v836
  %v1354 = vpop.f32.mrf.mxu0
  %v1355 = vadd.f32 %v1066, %v1354
  %v1356 = vpop.f32.mrf.mxu0
  %v1357 = vpop.f32.mrf.mxu0
  %v1358 = vadd.f32 %v1069, %v1357
  %v1359 = vpop.f32.mrf.mxu0
  %1360 = vmatprep.mubr.bf16.mxu0 0
  %1361 = vmatmul.mubr.bf16.gmra.mxu0 %v839
  %v1362 = vpop.f32.mrf.mxu0
  %v1363 = vadd.f32 %v1074, %v1362
  %v1364 = vpop.f32.mrf.mxu0
  %v1365 = vpop.f32.mrf.mxu0
  %v1366 = vadd.f32 %v1077, %v1365
  %v1367 = vpop.f32.mrf.mxu0
  %1368 = vmatprep.mubr.bf16.mxu0 0
  %1369 = vmatmul.mubr.bf16.gmra.mxu0 %v842
  %v1370 = vpop.f32.mrf.mxu0
  %v1371 = vadd.f32 %v1082, %v1370
  %v1372 = vpop.f32.mrf.mxu0
  %v1373 = vpop.f32.mrf.mxu0
  %v1374 = vadd.f32 %v1085, %v1373
  %v1375 = vpop.f32.mrf.mxu0
  %1376 = vmatprep.mubr.bf16.mxu0 0
  %1377 = vmatmul.mubr.bf16.gmra.mxu0 %v845
  %v1378 = vpop.f32.mrf.mxu0
  %v1379 = vadd.f32 %v1090, %v1378
  %v1380 = vpop.f32.mrf.mxu0
  %v1381 = vpop.f32.mrf.mxu0
  %v1382 = vadd.f32 %v1093, %v1381
  %v1383 = vpop.f32.mrf.mxu0
  %1384 = vmatprep.mubr.bf16.mxu0 0
  %1385 = vmatmul.mubr.bf16.gmra.mxu0 %v848
  %v1386 = vpop.f32.mrf.mxu0
  %v1387 = vadd.f32 %v1098, %v1386
  %v1388 = vpop.f32.mrf.mxu0
  %v1389 = vpop.f32.mrf.mxu0
  %v1390 = vadd.f32 %v1101, %v1389
  %v1391 = vpop.f32.mrf.mxu0
  %1392 = vmatprep.mubr.bf16.mxu0 0
  %1393 = vmatmul.mubr.bf16.gmra.mxu0 %v851
  %v1394 = vpop.f32.mrf.mxu0
  %v1395 = vadd.f32 %v1106, %v1394
  %v1396 = vpop.f32.mrf.mxu0
  %v1397 = vpop.f32.mrf.mxu0
  %v1398 = vadd.f32 %v1109, %v1397
  %v1399 = vpop.f32.mrf.mxu0
  %1400 = vmatprep.mubr.bf16.mxu0 0
  %1401 = vmatmul.mubr.bf16.gmra.mxu0 %v854
  %v1402 = vpop.f32.mrf.mxu0
  %v1403 = vadd.f32 %v1114, %v1402
  %v1404 = vpop.f32.mrf.mxu0
  %v1405 = vpop.f32.mrf.mxu0
  %v1406 = vadd.f32 %v1117, %v1405
  %v1407 = vpop.f32.mrf.mxu0
  %1408 = vmatprep.mubr.bf16.mxu0 0
  %1409 = vmatmul.mubr.bf16.gmra.mxu0 %v857
  %v1410 = vpop.f32.mrf.mxu0
  %v1411 = vadd.f32 %v1122, %v1410
  %v1412 = vpop.f32.mrf.mxu0
  %v1413 = vpop.f32.mrf.mxu0
  %v1414 = vadd.f32 %v1125, %v1413
  %v1415 = vpop.f32.mrf.mxu0
  %1416 = vmatprep.mubr.bf16.mxu0 0
  %1417 = vmatmul.mubr.bf16.gmra.mxu0 %v860
  %v1418 = vpop.f32.mrf.mxu0
  %v1419 = vadd.f32 %v1130, %v1418
  %v1420 = vpop.f32.mrf.mxu0
  %v1421 = vpop.f32.mrf.mxu0
  %v1422 = vadd.f32 %v1133, %v1421
  %v1423 = vpop.f32.mrf.mxu0
  %1424 = vmatprep.mubr.bf16.mxu0 0
  %1425 = vmatmul.mubr.bf16.gmra.mxu0 %v863
  %v1426 = vpop.f32.mrf.mxu0
  %v1427 = vadd.f32 %v1138, %v1426
  %v1428 = vpop.f32.mrf.mxu0
  %v1429 = vpop.f32.mrf.mxu0
  %v1430 = vadd.f32 %v1141, %v1429
  %v1431 = vpop.f32.mrf.mxu0
  %1432 = vmatprep.mubr.bf16.mxu0 0
  %1433 = vmatmul.mubr.bf16.gmra.mxu0 %v866
  %v1434 = vpop.f32.mrf.mxu0
  %v1435 = vadd.f32 %v1146, %v1434
  %v1436 = vpop.f32.mrf.mxu0
  %v1437 = vpop.f32.mrf.mxu0
  %v1438 = vadd.f32 %v1149, %v1437
  %v1439 = vpop.f32.mrf.mxu0
  %1440 = vmatprep.mubr.bf16.mxu0 0
  %1441 = vmatmul.mubr.bf16.gmra.mxu0 %v869
  %v1442 = vpop.f32.mrf.mxu0
  %v1443 = vadd.f32 %v1154, %v1442
  %v1444 = vpop.f32.mrf.mxu0
  %v1445 = vpop.f32.mrf.mxu0
  %v1446 = vadd.f32 %v1157, %v1445
  %v1447 = vpop.f32.mrf.mxu0
  %1448 = vdwg.mxu0
  %v1449 = vmax.f32 %v1195, 0.0
  %v1450 = vmax.f32 %v1198, 0.0
  %v1451 = vmax.f32 %v1203, 0.0
  %v1452 = vmax.f32 %v1206, 0.0
  %v1453 = vmax.f32 %v1211, 0.0
  %v1454 = vmax.f32 %v1214, 0.0
  %v1455 = vmax.f32 %v1219, 0.0
  %v1456 = vmax.f32 %v1222, 0.0
  %v1457 = vmax.f32 %v1227, 0.0
  %v1458 = vmax.f32 %v1230, 0.0
  %v1459 = vmax.f32 %v1235, 0.0
  %v1460 = vmax.f32 %v1238, 0.0
  %v1461 = vmax.f32 %v1243, 0.0
  %v1462 = vmax.f32 %v1246, 0.0
  %v1463 = vmax.f32 %v1251, 0.0
  %v1464 = vmax.f32 %v1254, 0.0
  %v1465 = vmax.f32 %v1259, 0.0
  %v1466 = vmax.f32 %v1262, 0.0
  %v1467 = vmax.f32 %v1267, 0.0
  %v1468 = vmax.f32 %v1270, 0.0
  %v1469 = vmax.f32 %v1275, 0.0
  %v1470 = vmax.f32 %v1278, 0.0
  %v1471 = vmax.f32 %v1283, 0.0
  %v1472 = vmax.f32 %v1286, 0.0
  %v1473 = vmax.f32 %v1291, 0.0
  %v1474 = vmax.f32 %v1294, 0.0
  %v1475 = vmax.f32 %v1299, 0.0
  %v1476 = vmax.f32 %v1302, 0.0
  %v1477 = vmax.f32 %v1307, 0.0
  %v1478 = vmax.f32 %v1310, 0.0
  %v1479 = vmax.f32 %v1315, 0.0
  %v1480 = vmax.f32 %v1318, 0.0
  %v1481 = vmax.f32 %v1323, 0.0
  %v1482 = vmax.f32 %v1326, 0.0
  %v1483 = vmax.f32 %v1331, 0.0
  %v1484 = vmax.f32 %v1334, 0.0
  %v1485 = vmax.f32 %v1339, 0.0
  %v1486 = vmax.f32 %v1342, 0.0
  %v1487 = vmax.f32 %v1347, 0.0
  %v1488 = vmax.f32 %v1350, 0.0
  %v1489 = vmax.f32 %v1355, 0.0
  %v1490 = vmax.f32 %v1358, 0.0
  %v1491 = vmax.f32 %v1363, 0.0
  %v1492 = vmax.f32 %v1366, 0.0
  %v1493 = vmax.f32 %v1371, 0.0
  %v1494 = vmax.f32 %v1374, 0.0
  %v1495 = vmax.f32 %v1379, 0.0
  %v1496 = vmax.f32 %v1382, 0.0
  %v1497 = vmax.f32 %v1387, 0.0
  %v1498 = vmax.f32 %v1390, 0.0
  %v1499 = vmax.f32 %v1395, 0.0
  %v1500 = vmax.f32 %v1398, 0.0
  %v1501 = vmax.f32 %v1403, 0.0
  %v1502 = vmax.f32 %v1406, 0.0
  %v1503 = vmax.f32 %v1411, 0.0
  %v1504 = vmax.f32 %v1414, 0.0
  %v1505 = vmax.f32 %v1419, 0.0
  %v1506 = vmax.f32 %v1422, 0.0
  %v1507 = vmax.f32 %v1427, 0.0
  %v1508 = vmax.f32 %v1430, 0.0
  %v1509 = vmax.f32 %v1435, 0.0
  %v1510 = vmax.f32 %v1438, 0.0
  %v1511 = vmax.f32 %v1443, 0.0
  %v1512 = vmax.f32 %v1446, 0.0
  %1513 = vst.msk [vmem:[%s3] sm:$0xff] %vm774, %v1449
  %1514 = vst.msk [vmem:[%s3 + $0x8] sm:$0xff] %vm774, %v1450
  %1515 = vst.msk [vmem:[%s3 + $0x10] sm:$0xff] %vm774, %v1451
  %1516 = vst.msk [vmem:[%s3 + $0x18] sm:$0xff] %vm774, %v1452
  %1517 = vst.msk [vmem:[%s3 + $0x20] sm:$0xff] %vm774, %v1453
  %1518 = vst.msk [vmem:[%s3 + $0x28] sm:$0xff] %vm774, %v1454
  %1519 = vst.msk [vmem:[%s3 + $0x30] sm:$0xff] %vm774, %v1455
  %1520 = vst.msk [vmem:[%s3 + $0x38] sm:$0xff] %vm774, %v1456
  %1521 = vst.msk [vmem:[%s3 + $0x40] sm:$0xff] %vm774, %v1457
  %1522 = vst.msk [vmem:[%s3 + $0x48] sm:$0xff] %vm774, %v1458
  %1523 = vst.msk [vmem:[%s3 + $0x50] sm:$0xff] %vm774, %v1459
  %1524 = vst.msk [vmem:[%s3 + $0x58] sm:$0xff] %vm774, %v1460
  %1525 = vst.msk [vmem:[%s3 + $0x60] sm:$0xff] %vm774, %v1461
  %1526 = vst.msk [vmem:[%s3 + $0x68] sm:$0xff] %vm774, %v1462
  %1527 = vst.msk [vmem:[%s3 + $0x70] sm:$0xff] %vm774, %v1463
  %1528 = vst.msk [vmem:[%s3 + $0x78] sm:$0xff] %vm774, %v1464
  %1529 = vst.msk [vmem:[%s3 + $0x80] sm:$0xff] %vm774, %v1465
  %1530 = vst.msk [vmem:[%s3 + $0x88] sm:$0xff] %vm774, %v1466
  %1531 = vst.msk [vmem:[%s3 + $0x90] sm:$0xff] %vm774, %v1467
  %1532 = vst.msk [vmem:[%s3 + $0x98] sm:$0xff] %vm774, %v1468
  %1533 = vst.msk [vmem:[%s3 + $0xa0] sm:$0xff] %vm774, %v1469
  %1534 = vst.msk [vmem:[%s3 + $0xa8] sm:$0xff] %vm774, %v1470
  %1535 = vst.msk [vmem:[%s3 + $0xb0] sm:$0xff] %vm774, %v1471
  %1536 = vst.msk [vmem:[%s3 + $0xb8] sm:$0xff] %vm774, %v1472
  %1537 = vst.msk [vmem:[%s3 + $0xc0] sm:$0xff] %vm774, %v1473
  %1538 = vst.msk [vmem:[%s3 + $0xc8] sm:$0xff] %vm774, %v1474
  %1539 = vst.msk [vmem:[%s3 + $0xd0] sm:$0xff] %vm774, %v1475
  %1540 = vst.msk [vmem:[%s3 + $0xd8] sm:$0xff] %vm774, %v1476
  %1541 = vst.msk [vmem:[%s3 + $0xe0] sm:$0xff] %vm774, %v1477
  %1542 = vst.msk [vmem:[%s3 + $0xe8] sm:$0xff] %vm774, %v1478
  %1543 = vst.msk [vmem:[%s3 + $0xf0] sm:$0xff] %vm774, %v1479
  %1544 = vst.msk [vmem:[%s3 + $0xf8] sm:$0xff] %vm774, %v1480
  %1545 = vst.msk [vmem:[%s3 + $0x100] sm:$0xff] %vm774, %v1481
  %1546 = vst.msk [vmem:[%s3 + $0x108] sm:$0xff] %vm774, %v1482
  %1547 = vst.msk [vmem:[%s3 + $0x110] sm:$0xff] %vm774, %v1483
  %1548 = vst.msk [vmem:[%s3 + $0x118] sm:$0xff] %vm774, %v1484
  %1549 = vst.msk [vmem:[%s3 + $0x120] sm:$0xff] %vm774, %v1485
  %1550 = vst.msk [vmem:[%s3 + $0x128] sm:$0xff] %vm774, %v1486
  %1551 = vst.msk [vmem:[%s3 + $0x130] sm:$0xff] %vm774, %v1487
  %1552 = vst.msk [vmem:[%s3 + $0x138] sm:$0xff] %vm774, %v1488
  %1553 = vst.msk [vmem:[%s3 + $0x140] sm:$0xff] %vm774, %v1489
  %1554 = vst.msk [vmem:[%s3 + $0x148] sm:$0xff] %vm774, %v1490
  %1555 = vst.msk [vmem:[%s3 + $0x150] sm:$0xff] %vm774, %v1491
  %1556 = vst.msk [vmem:[%s3 + $0x158] sm:$0xff] %vm774, %v1492
  %1557 = vst.msk [vmem:[%s3 + $0x160] sm:$0xff] %vm774, %v1493
  %1558 = vst.msk [vmem:[%s3 + $0x168] sm:$0xff] %vm774, %v1494
  %1559 = vst.msk [vmem:[%s3 + $0x170] sm:$0xff] %vm774, %v1495
  %1560 = vst.msk [vmem:[%s3 + $0x178] sm:$0xff] %vm774, %v1496
  %1561 = vst.msk [vmem:[%s3 + $0x180] sm:$0xff] %vm774, %v1497
  %1562 = vst.msk [vmem:[%s3 + $0x188] sm:$0xff] %vm774, %v1498
  %1563 = vst.msk [vmem:[%s3 + $0x190] sm:$0xff] %vm774, %v1499
  %1564 = vst.msk [vmem:[%s3 + $0x198] sm:$0xff] %vm774, %v1500
  %1565 = vst.msk [vmem:[%s3 + $0x1a0] sm:$0xff] %vm774, %v1501
  %1566 = vst.msk [vmem:[%s3 + $0x1a8] sm:$0xff] %vm774, %v1502
  %1567 = vst.msk [vmem:[%s3 + $0x1b0] sm:$0xff] %vm774, %v1503
  %1568 = vst.msk [vmem:[%s3 + $0x1b8] sm:$0xff] %vm774, %v1504
  %1569 = vst.msk [vmem:[%s3 + $0x1c0] sm:$0xff] %vm774, %v1505
  %1570 = vst.msk [vmem:[%s3 + $0x1c8] sm:$0xff] %vm774, %v1506
  %1571 = vst.msk [vmem:[%s3 + $0x1d0] sm:$0xff] %vm774, %v1507
  %1572 = vst.msk [vmem:[%s3 + $0x1d8] sm:$0xff] %vm774, %v1508
  %1573 = vst.msk [vmem:[%s3 + $0x1e0] sm:$0xff] %vm774, %v1509
  %1574 = vst.msk [vmem:[%s3 + $0x1e8] sm:$0xff] %vm774, %v1510
  %1575 = vst.msk [vmem:[%s3 + $0x1f0] sm:$0xff] %vm774, %v1511
  %1576 = vst.msk [vmem:[%s3 + $0x1f8] sm:$0xff] %vm774, %v1512
  // Predicated region
  $region14: #{tpu_custom_call.1} parent=0 // pred_check
    _
  $region15: #{tpu_custom_call.1} parent=0 // pred_check_branch
    %1578 = sbr.rel (0) target = $region17
  $region16: #{tpu_custom_call.1} parent=0 // pred_region
    _
  $region17: #{tpu_custom_call.1} parent=0 // pred_fallthru
    _
  // Predicated region
  $region18: #{tpu_custom_call.1} parent=0 // pred_check
    _
  $region19: #{tpu_custom_call.1} parent=0 // pred_check_branch
    %1580 = sbr.rel (0) target = $region21
  $region20: #{tpu_custom_call.1} parent=0 // pred_region
    _
  $region21: #{tpu_custom_call.1} parent=0 // pred_fallthru
    _

</llo_original>
